<compile_context>
chip_gen: v7x
topology: tpu7x:2x2x1
jax: 0.10.0
libtpu: 0.0.40
codegen_flags: <defaults>
</compile_context>

<pallas_src>
import functools

import jax
import jax.numpy as jnp
from jax import lax
from jax.experimental import pallas as pl
from jax.experimental.pallas import tpu as pltpu


def _attn_kernel(hid_ref, enc_ref, wh_ref, we_ref, ba_ref, ws_ref, out_ref, *,
                 batch, seq_len, rows_total, rows_per_block):
    # hid_ref: (B, H)            enc_ref: (mt, H)  -- rows are s-major: r = s*B + b
    # wh_ref/we_ref: (H, H)      ba_ref/ws_ref: (1, H)
    # out_ref: (B, S)            -- full output block, resident across the grid
    m = pl.program_id(0)
    r0f = (m * rows_per_block).astype(jnp.float32)   # global row offset of this tile

    @pl.when(m == 0)
    def _init():
        out_ref[...] = jnp.zeros_like(out_ref)

    # ---- projections: plain 2-D MXU matmuls with f32 accumulation -------------
    # c[b, k] = sum_j hid[b, j] * Wh[k, j] + bias[k]   (Linear weight un-transposed)
    c = lax.dot_general(hid_ref[...], wh_ref[...],
                        dimension_numbers=(((1,), (1,)), ((), ())),
                        preferred_element_type=jnp.float32) + ba_ref[...]       # (B, H)

    # e[r, k] = sum_j enc[r, j] * We[k, j]  -- the one big (rows, H) @ (H, H) matmul
    e_proj = lax.dot_general(enc_ref[...], we_ref[...],
                             dimension_numbers=(((1,), (1,)), ((), ())),
                             preferred_element_type=jnp.float32)                # (mt, H)

    # ---- per-row index math (exact small-integer arithmetic in f32) -----------
    # global row r -> (s, b) = (r // B, r % B)
    r_col = (lax.broadcasted_iota(jnp.int32, (rows_per_block, 1), 0)
             .astype(jnp.float32) + r0f)                                        # (mt, 1)
    s_col = jnp.floor(r_col / float(batch))                                     # (mt, 1)
    b_col = r_col - s_col * float(batch)                                        # (mt, 1)

    # one-hot over batch: sel[r, b] = [r % B == b]; h_broad row r gets c[r % B]
    bi = lax.broadcasted_iota(jnp.int32, (rows_per_block, batch), 1).astype(jnp.float32)
    sel = (b_col == bi).astype(jnp.float32)                                     # (mt, B)
    h_broad = jnp.dot(sel, c, preferred_element_type=jnp.float32)               # (mt, H)

    energy = jnp.tanh(e_proj + h_broad)                                         # (mt, H)

    # score: VPU reduction over H against the (1, H) score weight
    # (replaces the old N=1 MXU matmul + (S,1)->(1,S) transpose epilogue)
    q = jnp.sum(energy * ws_ref[...], axis=-1, keepdims=True)                   # (mt, 1)
    # kill padded rows of the last (partial) tile
    q = jnp.where(r_col < float(rows_total), q, 0.0)

    # scatter rows into the lane-major (B, S) score matrix with one-hot matmuls:
    #   out[b, s] += q[r]  where r = s*B + b
    si = lax.broadcasted_iota(jnp.int32, (rows_per_block, seq_len), 1).astype(jnp.float32)
    g = (s_col == si).astype(jnp.float32)                                       # (mt, S)

    bt_i = lax.broadcasted_iota(jnp.int32, (batch, rows_per_block), 0).astype(jnp.float32)
    rt_i = (lax.broadcasted_iota(jnp.int32, (batch, rows_per_block), 1)
            .astype(jnp.float32) + r0f)
    st_i = jnp.floor(rt_i / float(batch))
    sel_t = ((rt_i - st_i * float(batch)) == bt_i).astype(jnp.float32)          # (B, mt)

    out_ref[...] += jnp.dot(sel_t, q * g, preferred_element_type=jnp.float32)   # (B, S)

    # ---- finalize: softmax over S on the lane-major (B, S) block --------------
    @pl.when(m == pl.num_programs(0) - 1)
    def _finalize():
        scores = out_ref[...]
        mx = jnp.max(scores, axis=-1, keepdims=True)
        ex = jnp.exp(scores - mx)
        denom = jnp.sum(ex, axis=-1, keepdims=True)
        inv = pl.reciprocal(denom, approx=True)          # EUP slot
        inv = inv * (2.0 - denom * inv)                  # Newton steps: restore full f32
        inv = inv * (2.0 - denom * inv)                  # accuracy at negligible cost
        out_ref[...] = (ex * inv).astype(out_ref.dtype)
    # TODO(synk): seq_mask / dropout paths are None in this forward and are not exercised.


def attn_forward(hidden, encoder_outputs, w_attn, b_attn, w_score, *,
                 rows_per_block=256, matmul_dtype=None):
    """hidden: (1, B, H), encoder_outputs: (S, B, H) -> (B, 1, S)."""
    S, B, H = encoder_outputs.shape
    M = S * B
    md = matmul_dtype or encoder_outputs.dtype   # pass jnp.bfloat16 on v6e/v7x for 2x MXU rate

    # Free row-major flatten (no batch-major HBM transpose of the dominant tensor).
    enc_flat = encoder_outputs.reshape(M, H).astype(md)
    hid = hidden.reshape(B, H).astype(md)

    # nn.Linear weights stay un-transposed; the kernel contracts their 2nd axis.
    wh = w_attn[:, :H].astype(md)                 # hidden half of Linear(2H -> H)
    we = w_attn[:, H:].astype(md)                 # encoder half
    ba = b_attn.reshape(1, H).astype(jnp.float32)
    ws = w_score.reshape(1, H).astype(jnp.float32)

    mt = min(rows_per_block, M)
    grid = (pl.cdiv(M, mt),)

    kernel = functools.partial(_attn_kernel, batch=B, seq_len=S,
                               rows_total=M, rows_per_block=mt)

    out = pl.pallas_call(
        kernel,
        out_shape=jax.ShapeDtypeStruct((B, S), jnp.float32),
        grid_spec=pltpu.PrefetchScalarGridSpec(
            num_scalar_prefetch=0,
            grid=grid,
            in_specs=[
                pl.BlockSpec((B, H), lambda m: (0, 0)),     # hidden (constant index)
                pl.BlockSpec((mt, H), lambda m: (m, 0)),    # flattened encoder rows
                # NOTE: at production H one would mark these constant-index weight
                # specs single-buffered (pl.Buffered(1)) to save VMEM; negligible here.
                pl.BlockSpec((H, H), lambda m: (0, 0)),     # Wh
                pl.BlockSpec((H, H), lambda m: (0, 0)),     # We
                pl.BlockSpec((1, H), lambda m: (0, 0)),     # attn bias
                pl.BlockSpec((1, H), lambda m: (0, 0)),     # score weight
            ],
            # whole (B, S) output as ONE lane-major block, resident across the grid
            out_specs=pl.BlockSpec((B, S), lambda m: (0, 0)),
        ),
        compiler_params=pltpu.CompilerParams(
            dimension_semantics=("arbitrary",)),            # row axis is a reduction
    )(hid, enc_flat, wh, we, ba, ws)

    # (B, S) -> (B, 1, S), matching attn_energies.unsqueeze(1)
    return out[:, None, :]


def attn_reference(hidden, encoder_outputs, w_attn, b_attn, w_score):
    """Pure-JAX replica of the PyTorch forward for validation."""
    S, B, H = encoder_outputs.shape
    hid_rep = jnp.broadcast_to(hidden, (S, B, H))                     # hidden.repeat(S,1,1)
    energy_in = jnp.concatenate((hid_rep, encoder_outputs), axis=2)   # (S, B, 2H)
    energy_in = energy_in.reshape(-1, 2 * H)                          # (S*B, 2H)
    e = jnp.tanh(energy_in @ w_attn.T + b_attn)                       # (S*B, H)
    s = (e @ w_score.T)[:, 0]                                         # (S*B,)
    s = s.reshape(S, B).T                                             # (B, S)
    sm = jax.nn.softmax(s, axis=1)
    return sm[:, None, :]                                             # (B, 1, S)


if __name__ == "__main__":
    # small, module-consistent shapes
    B, S, H = 2, 8, 32
    key = jax.random.PRNGKey(0)
    k1, k2, k3, k4, k5 = jax.random.split(key, 5)

    # deterministic synthetic parameters (shapes from nn.Linear in __init__)
    w_attn = jax.random.normal(k1, (H, 2 * H), dtype=jnp.float32) * 0.1   # attn.weight
    b_attn = jax.random.normal(k2, (H,), dtype=jnp.float32) * 0.1         # attn.bias
    w_score = jax.random.normal(k3, (1, H), dtype=jnp.float32) * 0.1      # score.weight

    # inputs
    hidden = jax.random.normal(k4, (1, B, H), dtype=jnp.float32)
    encoder_outputs = jax.random.normal(k5, (S, B, H), dtype=jnp.float32)

    out = attn_forward(hidden, encoder_outputs, w_attn, b_attn, w_score)
    out = jax.block_until_ready(out)

    ref = attn_reference(hidden, encoder_outputs, w_attn, b_attn, w_score)
    assert out.shape == (B, 1, S), out.shape
    assert jnp.allclose(out, ref, atol=1e-5, rtol=1e-5), float(jnp.max(jnp.abs(out - ref)))

    print("KERNEL_OK")
</pallas_src>

<mosaic_0001>
module attributes {stable_mosaic.version = 11 : i64} {
  func.func @_attn_kernel(%arg0: i32, %arg1: memref<2x32xf32, #tpu.memory_space<vmem>>, %arg2: memref<16x32xf32, #tpu.memory_space<vmem>>, %arg3: memref<32x32xf32, #tpu.memory_space<vmem>>, %arg4: memref<32x32xf32, #tpu.memory_space<vmem>>, %arg5: memref<1x32xf32, #tpu.memory_space<vmem>>, %arg6: memref<1x32xf32, #tpu.memory_space<vmem>>, %arg7: memref<2x8xf32, #tpu.memory_space<vmem>>) attributes {dimension_semantics = [#tpu.dimension_semantics<arbitrary>], iteration_bounds = array<i64: 1>, scalar_prefetch = 0 : i64, scratch_operands = 0 : i64, tpu.core_type = #tpu.core_type<tc>, window_params = [{pipeline_mode = #tpu.pipeline_mode<synchronous>, transform_indices = @transform_0, window_bounds = array<i64: 2, 32>}, {transform_indices = @transform_1, window_bounds = array<i64: 16, 32>}, {pipeline_mode = #tpu.pipeline_mode<synchronous>, transform_indices = @transform_2, window_bounds = array<i64: 32, 32>}, {pipeline_mode = #tpu.pipeline_mode<synchronous>, transform_indices = @transform_3, window_bounds = array<i64: 32, 32>}, {pipeline_mode = #tpu.pipeline_mode<synchronous>, transform_indices = @transform_4, window_bounds = array<i64: 1, 32>}, {pipeline_mode = #tpu.pipeline_mode<synchronous>, transform_indices = @transform_5, window_bounds = array<i64: 1, 32>}, {pipeline_mode = #tpu.pipeline_mode<synchronous>, transform_indices = @transform_6, window_bounds = array<i64: 2, 8>}]} {
    %c16_i32 = arith.constant 16 : i32
    %0 = arith.muli %arg0, %c16_i32 : i32
    %1 = arith.sitofp %0 : i32 to f32
    %c0_i32 = arith.constant 0 : i32
    %2 = arith.cmpi eq, %arg0, %c0_i32 : i32
    %3 = arith.extui %2 : i1 to i32
    %c0_i32_0 = arith.constant 0 : i32
    %4 = arith.cmpi ne, %3, %c0_i32_0 : i32
    scf.if %4 {
      %cst_28 = arith.constant 0.000000e+00 : f32
      %72 = vector.broadcast %cst_28 : f32 to vector<2x8xf32>
      %c0_29 = arith.constant 0 : index
      %c0_30 = arith.constant 0 : index
      %73 = vector.load %arg7[%c0_29, %c0_30] : memref<2x8xf32, #tpu.memory_space<vmem>>, vector<2x8xf32>
      tpu.vector_store %arg7[%c0_29, %c0_30], %72 {strides = array<i32>} : memref<2x8xf32, #tpu.memory_space<vmem>>, vector<2x8xf32>,
    } else {
    }
    %c0 = arith.constant 0 : index
    %c0_1 = arith.constant 0 : index
    %5 = vector.load %arg1[%c0, %c0_1] : memref<2x32xf32, #tpu.memory_space<vmem>>, vector<2x32xf32>
    %c0_2 = arith.constant 0 : index
    %c0_3 = arith.constant 0 : index
    %6 = vector.load %arg3[%c0_2, %c0_3] : memref<32x32xf32, #tpu.memory_space<vmem>>, vector<32x32xf32>
    %cst = arith.constant dense<0.000000e+00> : vector<2x32xf32>
    %7 = tpu.matmul %5, %6, %cst {dimension_numbers = #tpu.dot_dimension_numbers<[1], [1], [0], [0], [0, 0, 1, 0], [], []>} : vector<2x32xf32>, vector<32x32xf32>, vector<2x32xf32> -> vector<2x32xf32>
    %c0_4 = arith.constant 0 : index
    %c0_5 = arith.constant 0 : index
    %8 = vector.load %arg5[%c0_4, %c0_5] : memref<1x32xf32, #tpu.memory_space<vmem>>, vector<1x32xf32>
    %9 = vector.broadcast %8 : vector<1x32xf32> to vector<2x32xf32>
    %10 = arith.addf %7, %9 : vector<2x32xf32>
    %c0_6 = arith.constant 0 : index
    %c0_7 = arith.constant 0 : index
    %11 = vector.load %arg2[%c0_6, %c0_7] : memref<16x32xf32, #tpu.memory_space<vmem>>, vector<16x32xf32>
    %c0_8 = arith.constant 0 : index
    %c0_9 = arith.constant 0 : index
    %12 = vector.load %arg4[%c0_8, %c0_9] : memref<32x32xf32, #tpu.memory_space<vmem>>, vector<32x32xf32>
    %cst_10 = arith.constant dense<0.000000e+00> : vector<16x32xf32>
    %13 = tpu.matmul %11, %12, %cst_10 {dimension_numbers = #tpu.dot_dimension_numbers<[1], [1], [0], [0], [0, 0, 1, 0], [], []>} : vector<16x32xf32>, vector<32x32xf32>, vector<16x32xf32> -> vector<16x32xf32>
    %14 = tpu.iota {dimensions = array<i32: 0>} : vector<16x1xi32>
    %15 = arith.sitofp %14 : vector<16x1xi32> to vector<16x1xf32>
    %16 = vector.broadcast %1 : f32 to vector<16x1xf32>
    %17 = arith.addf %15, %16 : vector<16x1xf32>
    %cst_11 = arith.constant 2.000000e+00 : f32
    %18 = vector.broadcast %cst_11 : f32 to vector<16x1xf32>
    %19 = arith.divf %17, %18 : vector<16x1xf32>
    %20 = math.floor %19 : vector<16x1xf32>
    %cst_12 = arith.constant 2.000000e+00 : f32
    %21 = vector.broadcast %cst_12 : f32 to vector<16x1xf32>
    %22 = arith.mulf %20, %21 : vector<16x1xf32>
    %23 = arith.subf %17, %22 : vector<16x1xf32>
    %24 = tpu.iota {dimensions = array<i32: 1>} : vector<16x2xi32>
    %25 = arith.sitofp %24 : vector<16x2xi32> to vector<16x2xf32>
    %26 = vector.broadcast %23 : vector<16x1xf32> to vector<16x2xf32>
    %27 = arith.cmpf oeq, %26, %25 : vector<16x2xf32>
    %28 = arith.extui %27 : vector<16x2xi1> to vector<16x2xi32>
    %29 = arith.sitofp %28 : vector<16x2xi32> to vector<16x2xf32>
    %cst_13 = arith.constant dense<0.000000e+00> : vector<16x32xf32>
    %30 = tpu.matmul %29, %10, %cst_13 {dimension_numbers = #tpu.dot_dimension_numbers<[1], [0], [0], [1], [0, 0, 1, 1], [], []>} : vector<16x2xf32>, vector<2x32xf32>, vector<16x32xf32> -> vector<16x32xf32>
    %31 = arith.addf %13, %30 : vector<16x32xf32>
    %32 = math.tanh %31 : vector<16x32xf32>
    %c0_14 = arith.constant 0 : index
    %c0_15 = arith.constant 0 : index
    %33 = vector.load %arg6[%c0_14, %c0_15] : memref<1x32xf32, #tpu.memory_space<vmem>>, vector<1x32xf32>
    %34 = vector.broadcast %33 : vector<1x32xf32> to vector<16x32xf32>
    %35 = arith.mulf %32, %34 : vector<16x32xf32>
    %cst_16 = arith.constant dense<0.000000e+00> : vector<16xf32>
    %36 = vector.multi_reduction <add>, %35, %cst_16 [1] : vector<16x32xf32> to vector<16xf32>
    %37 = vector.shape_cast %36 : vector<16xf32> to vector<16x1xf32>
    %cst_17 = arith.constant 1.600000e+01 : f32
    %38 = vector.broadcast %cst_17 : f32 to vector<16x1xf32>
    %39 = arith.cmpf olt, %17, %38 : vector<16x1xf32>
    %cst_18 = arith.constant 0.000000e+00 : f32
    %40 = vector.broadcast %cst_18 : f32 to vector<16x1xf32>
    %41 = arith.select %39, %37, %40 : vector<16x1xi1>, vector<16x1xf32>
    %42 = tpu.iota {dimensions = array<i32: 1>} : vector<16x8xi32>
    %43 = arith.sitofp %42 : vector<16x8xi32> to vector<16x8xf32>
    %44 = vector.broadcast %20 : vector<16x1xf32> to vector<16x8xf32>
    %45 = arith.cmpf oeq, %44, %43 : vector<16x8xf32>
    %46 = arith.extui %45 : vector<16x8xi1> to vector<16x8xi32>
    %47 = arith.sitofp %46 : vector<16x8xi32> to vector<16x8xf32>
    %48 = tpu.iota {dimensions = array<i32: 0>} : vector<2x16xi32>
    %49 = arith.sitofp %48 : vector<2x16xi32> to vector<2x16xf32>
    %50 = tpu.iota {dimensions = array<i32: 1>} : vector<2x16xi32>
    %51 = arith.sitofp %50 : vector<2x16xi32> to vector<2x16xf32>
    %52 = vector.broadcast %1 : f32 to vector<2x16xf32>
    %53 = arith.addf %51, %52 : vector<2x16xf32>
    %cst_19 = arith.constant 2.000000e+00 : f32
    %54 = vector.broadcast %cst_19 : f32 to vector<2x16xf32>
    %55 = arith.divf %53, %54 : vector<2x16xf32>
    %56 = math.floor %55 : vector<2x16xf32>
    %cst_20 = arith.constant 2.000000e+00 : f32
    %57 = vector.broadcast %cst_20 : f32 to vector<2x16xf32>
    %58 = arith.mulf %56, %57 : vector<2x16xf32>
    %59 = arith.subf %53, %58 : vector<2x16xf32>
    %60 = arith.cmpf oeq, %59, %49 : vector<2x16xf32>
    %61 = arith.extui %60 : vector<2x16xi1> to vector<2x16xi32>
    %62 = arith.sitofp %61 : vector<2x16xi32> to vector<2x16xf32>
    %c0_21 = arith.constant 0 : index
    %c0_22 = arith.constant 0 : index
    %63 = vector.load %arg7[%c0_21, %c0_22] : memref<2x8xf32, #tpu.memory_space<vmem>>, vector<2x8xf32>
    %64 = vector.broadcast %41 : vector<16x1xf32> to vector<16x8xf32>
    %65 = arith.mulf %64, %47 : vector<16x8xf32>
    %cst_23 = arith.constant dense<0.000000e+00> : vector<2x8xf32>
    %66 = tpu.matmul %62, %65, %cst_23 {dimension_numbers = #tpu.dot_dimension_numbers<[1], [0], [0], [1], [0, 0, 1, 1], [], []>} : vector<2x16xf32>, vector<16x8xf32>, vector<2x8xf32> -> vector<2x8xf32>
    %67 = arith.addf %63, %66 : vector<2x8xf32>
    %c0_24 = arith.constant 0 : index
    %c0_25 = arith.constant 0 : index
    %68 = vector.load %arg7[%c0_24, %c0_25] : memref<2x8xf32, #tpu.memory_space<vmem>>, vector<2x8xf32>
    tpu.vector_store %arg7[%c0_24, %c0_25], %67 {strides = array<i32>} : memref<2x8xf32, #tpu.memory_space<vmem>>, vector<2x8xf32>,
    %c0_i32_26 = arith.constant 0 : i32
    %69 = arith.cmpi eq, %arg0, %c0_i32_26 : i32
    %70 = arith.extui %69 : i1 to i32
    %c0_i32_27 = arith.constant 0 : i32
    %71 = arith.cmpi ne, %70, %c0_i32_27 : i32
    scf.if %71 {
      %c0_28 = arith.constant 0 : index
      %c0_29 = arith.constant 0 : index
      %72 = vector.load %arg7[%c0_28, %c0_29] : memref<2x8xf32, #tpu.memory_space<vmem>>, vector<2x8xf32>
      %cst_30 = arith.constant dense<0xFF800000> : vector<2xf32>
      %73 = vector.multi_reduction <maximumf>, %72, %cst_30 [1] : vector<2x8xf32> to vector<2xf32>
      %74 = vector.shape_cast %73 : vector<2xf32> to vector<2x1xf32>
      %75 = vector.broadcast %74 : vector<2x1xf32> to vector<2x8xf32>
      %76 = arith.subf %72, %75 : vector<2x8xf32>
      %77 = math.exp %76 : vector<2x8xf32>
      %cst_31 = arith.constant dense<0.000000e+00> : vector<2xf32>
      %78 = vector.multi_reduction <add>, %77, %cst_31 [1] : vector<2x8xf32> to vector<2xf32>
      %79 = vector.shape_cast %78 : vector<2xf32> to vector<2x1xf32>
      %80 = tpu.reciprocal %79 {approx = true} : vector<2x1xf32> -> vector<2x1xf32>
      %81 = arith.mulf %79, %80 : vector<2x1xf32>
      %cst_32 = arith.constant 2.000000e+00 : f32
      %82 = vector.broadcast %cst_32 : f32 to vector<2x1xf32>
      %83 = arith.subf %82, %81 : vector<2x1xf32>
      %84 = arith.mulf %80, %83 : vector<2x1xf32>
      %85 = arith.mulf %79, %84 : vector<2x1xf32>
      %cst_33 = arith.constant 2.000000e+00 : f32
      %86 = vector.broadcast %cst_33 : f32 to vector<2x1xf32>
      %87 = arith.subf %86, %85 : vector<2x1xf32>
      %88 = arith.mulf %84, %87 : vector<2x1xf32>
      %89 = vector.broadcast %88 : vector<2x1xf32> to vector<2x8xf32>
      %90 = arith.mulf %77, %89 : vector<2x8xf32>
      %c0_34 = arith.constant 0 : index
      %c0_35 = arith.constant 0 : index
      %91 = vector.load %arg7[%c0_34, %c0_35] : memref<2x8xf32, #tpu.memory_space<vmem>>, vector<2x8xf32>
      tpu.vector_store %arg7[%c0_34, %c0_35], %90 {strides = array<i32>} : memref<2x8xf32, #tpu.memory_space<vmem>>, vector<2x8xf32>,
    } else {
    }
    return
  }
  func.func @transform_0(%arg0: i32) -> (i32, i32) {
    %c0_i32 = arith.constant 0 : i32
    %c0_i32_0 = arith.constant 0 : i32
    %c0_i32_1 = arith.constant 0 : i32
    return %c0_i32, %c0_i32_0 : i32, i32
  }
  func.func @transform_1(%arg0: i32) -> (i32, i32) {
    %c0_i32 = arith.constant 0 : i32
    %c0_i32_0 = arith.constant 0 : i32
    return %arg0, %c0_i32 : i32, i32
  }
  func.func @transform_2(%arg0: i32) -> (i32, i32) {
    %c0_i32 = arith.constant 0 : i32
    %c0_i32_0 = arith.constant 0 : i32
    %c0_i32_1 = arith.constant 0 : i32
    return %c0_i32, %c0_i32_0 : i32, i32
  }
  func.func @transform_3(%arg0: i32) -> (i32, i32) {
    %c0_i32 = arith.constant 0 : i32
    %c0_i32_0 = arith.constant 0 : i32
    %c0_i32_1 = arith.constant 0 : i32
    return %c0_i32, %c0_i32_0 : i32, i32
  }
  func.func @transform_4(%arg0: i32) -> (i32, i32) {
    %c0_i32 = arith.constant 0 : i32
    %c0_i32_0 = arith.constant 0 : i32
    %c0_i32_1 = arith.constant 0 : i32
    return %c0_i32, %c0_i32_0 : i32, i32
  }
  func.func @transform_5(%arg0: i32) -> (i32, i32) {
    %c0_i32 = arith.constant 0 : i32
    %c0_i32_0 = arith.constant 0 : i32
    %c0_i32_1 = arith.constant 0 : i32
    return %c0_i32, %c0_i32_0 : i32, i32
  }
  func.func @transform_6(%arg0: i32) -> (i32, i32) {
    %c0_i32 = arith.constant 0 : i32
    %c0_i32_0 = arith.constant 0 : i32
    %c0_i32_1 = arith.constant 0 : i32
    return %c0_i32, %c0_i32_0 : i32, i32
  }
}

</mosaic_0001>

<llo_original>
// kernel: tpu_custom_call.1
$region0: #{tpu_custom_call.1}
  #allocation0 [shape = 'u32[]', space=smem, size = 0x4, offset = 0x4, fixed_abs, tag = 'smem constant byte address 0x4 - core index']
  #allocation1 [shape = 'u32[144,128]{1,0:T(1,128)}', space=vmem, size = 0x12000, scoped, tag = 'internal scratch']
  %s0 = inlined_call_operand.hbm [shape: f32[2,32], index: 0, kind: input, shape index: {}]
  %s1 = inlined_call_operand.hbm [shape: f32[16,32], index: 1, kind: input, shape index: {}]
  %s2 = inlined_call_operand.hbm [shape: f32[32,32], index: 2, kind: input, shape index: {}]
  %s3 = inlined_call_operand.hbm [shape: f32[32,32], index: 3, kind: input, shape index: {}]
  %s4 = inlined_call_operand.vmem [shape: f32[1,32], index: 4, kind: input, shape index: {}]
  %s5 = inlined_call_operand.vmem [shape: f32[1,32], index: 5, kind: input, shape index: {}]
  %s6 = inlined_call_operand.hbm [shape: f32[2,8], index: 6, kind: output, shape index: {}]
  %s7 = sld [smem:[#allocation0]]
  $region58: #{tpu_custom_call.1} parent=0
    _
  %s9 = ssub.s32 1, %s7
  %s10 = scalar_select 0, %s9, %s7
  $region1: #{tpu_custom_call.1} parent=0
    #allocation2 [shape = 'u8[1024]{0}', space=vmem, size = 0x400, scoped, tag = 'input window, operand 0, single buffered']
    #allocation3 [shape = 's32[1]{0}', space=sflag, size = 0x4, scoped, tag = 'scoped memory for tpu_custom_call.1']
    #allocation4 [shape = 's32[1]{0}', space=sflag, size = 0x4, scoped, tag = 'scoped memory for tpu_custom_call.1']
    #allocation5 [shape = 'u8[8192]{0}', space=vmem, size = 0x2000, scoped, tag = 'input window, operand 1, single buffered']
    #allocation6 [shape = 's32[1]{0}', space=sflag, size = 0x4, scoped, tag = 'scoped memory for tpu_custom_call.1']
    #allocation7 [shape = 'u8[16384]{0}', space=vmem, size = 0x4000, scoped, tag = 'input window, operand 2, single buffered']
    #allocation8 [shape = 'u8[16384]{0}', space=vmem, size = 0x4000, scoped, tag = 'input window, operand 3, single buffered']
    #allocation9 [shape = 's32[1]{0}', space=sflag, size = 0x4, scoped, tag = 'scoped memory for tpu_custom_call.1']
    #allocation10 [shape = 'u8[1024]{0}', space=vmem, size = 0x400, scoped, tag = 'output window, operand 0, single buffered']
    %11 = vsyncpa [#allocation3], 0
    %12 = vsyncpa [#allocation6], 0
    %13 = vsyncpa [#allocation9], 0
    %14 = vsyncpa [#allocation4], 0
    // Predicated region
    $region2: #{tpu_custom_call.1} parent=1 // pred_check
      _
    $region3: #{tpu_custom_call.1} parent=1 // pred_check_branch
      %16 = sbr.rel (0) target = $region5
    $region4: #{tpu_custom_call.1} parent=1 // pred_region
      %s18 = ssub.s32 32, 32
      %19 = vsyncadd [#allocation3], %s18
      %s21 = sshll.u32 [#allocation2], 4
      %s22 = int_to_ptr.vmem [resolvable:$true] %s21
      %24 = dma.hbm_to_vmem [thread:$0]  %s0, 32, %s22, [#allocation3]
    $region5: #{tpu_custom_call.1} parent=1 // pred_fallthru
      _
    // Predicated region
    $region6: #{tpu_custom_call.1} parent=1 // pred_check
      _
    $region7: #{tpu_custom_call.1} parent=1 // pred_check_branch
      %26 = sbr.rel (0) target = $region9
    $region8: #{tpu_custom_call.1} parent=1 // pred_region
      %s28 = ssub.s32 256, 256
      %29 = vsyncadd [#allocation6], %s28
      %s30 = sshll.u32 [#allocation5], 4
      %s31 = int_to_ptr.vmem [resolvable:$true] %s30
      %36 = dma.hbm_to_vmem [thread:$0]  %s1, 256, %s31, [#allocation6], 128, 128, 8
    $region9: #{tpu_custom_call.1} parent=1 // pred_fallthru
      _
    // Predicated region
    $region10: #{tpu_custom_call.1} parent=1 // pred_check
      _
    $region11: #{tpu_custom_call.1} parent=1 // pred_check_branch
      %38 = sbr.rel (0) target = $region13
    $region12: #{tpu_custom_call.1} parent=1 // pred_region
      %s40 = ssub.s32 512, 512
      %41 = vsyncadd [#allocation6], %s40
      %s42 = sshll.u32 [#allocation7], 4
      %s43 = int_to_ptr.vmem [resolvable:$true] %s42
      %48 = dma.hbm_to_vmem [thread:$0]  %s2, 512, %s43, [#allocation6], 128, 128, 8
    $region13: #{tpu_custom_call.1} parent=1 // pred_fallthru
      _
    // Predicated region
    $region14: #{tpu_custom_call.1} parent=1 // pred_check
      _
    $region15: #{tpu_custom_call.1} parent=1 // pred_check_branch
      %50 = sbr.rel (0) target = $region17
    $region16: #{tpu_custom_call.1} parent=1 // pred_region
      %s52 = ssub.s32 512, 512
      %53 = vsyncadd [#allocation9], %s52
      %s54 = sshll.u32 [#allocation8], 4
      %s55 = int_to_ptr.vmem [resolvable:$true] %s54
      %60 = dma.hbm_to_vmem [thread:$0]  %s3, 512, %s55, [#allocation9], 128, 128, 8
    $region17: #{tpu_custom_call.1} parent=1 // pred_fallthru
      _
    // Predicated region
    $region18: #{tpu_custom_call.1} parent=1 // pred_check
      _
    $region19: #{tpu_custom_call.1} parent=1 // pred_check_branch
      %62 = sbr.rel (0) target = $region21
    $region20: #{tpu_custom_call.1} parent=1 // pred_region
      _
    $region21: #{tpu_custom_call.1} parent=1 // pred_fallthru
      _
    // Predicated region
    $region22: #{tpu_custom_call.1} parent=1 // pred_check
      _
    $region23: #{tpu_custom_call.1} parent=1 // pred_check_branch
      %64 = sbr.rel (0) target = $region25
    $region24: #{tpu_custom_call.1} parent=1 // pred_region
      _
    $region25: #{tpu_custom_call.1} parent=1 // pred_fallthru
      _
    // Predicated region
    $region26: #{tpu_custom_call.1} parent=1 // pred_check
      _
    $region27: #{tpu_custom_call.1} parent=1 // pred_check_branch
      %66 = sbr.rel (0) target = $region29
    $region28: #{tpu_custom_call.1} parent=1 // pred_region
      %67 = dma.done [#allocation3], 32
    $region29: #{tpu_custom_call.1} parent=1 // pred_fallthru
      _
    // Predicated region
    $region30: #{tpu_custom_call.1} parent=1 // pred_check
      _
    $region31: #{tpu_custom_call.1} parent=1 // pred_check_branch
      %69 = sbr.rel (0) target = $region33
    $region32: #{tpu_custom_call.1} parent=1 // pred_region
      %70 = dma.done [#allocation6], 256
    $region33: #{tpu_custom_call.1} parent=1 // pred_fallthru
      _
    // Predicated region
    $region34: #{tpu_custom_call.1} parent=1 // pred_check
      _
    $region35: #{tpu_custom_call.1} parent=1 // pred_check_branch
      %72 = sbr.rel (0) target = $region37
    $region36: #{tpu_custom_call.1} parent=1 // pred_region
      %73 = dma.done [#allocation6], 512
    $region37: #{tpu_custom_call.1} parent=1 // pred_fallthru
      _
    // Predicated region
    $region38: #{tpu_custom_call.1} parent=1 // pred_check
      _
    $region39: #{tpu_custom_call.1} parent=1 // pred_check_branch
      %75 = sbr.rel (0) target = $region41
    $region40: #{tpu_custom_call.1} parent=1 // pred_region
      %76 = dma.done [#allocation9], 512
    $region41: #{tpu_custom_call.1} parent=1 // pred_fallthru
      _
    %s77 = smul.u32 0, 16
    %s78 = scvt.s32.f32 %s77
    %p79 = scmp.eq.s32.totalorder 0, 0
    // Predicated region
    $region42: #{tpu_custom_call.1} parent=1 // pred_check
      %p80 = pneg %p79
    $region43: #{tpu_custom_call.1} parent=1 // pred_check_branch
      %82 = sbr.rel (%p80) target = $region45
    $region44: #{tpu_custom_call.1} parent=1 // pred_region
      %vm83 = vcmask 58368
      %84 = vst.msk [vmem:[#allocation10] sm:$0x3] %vm83, 0.0
    $region45: #{tpu_custom_call.1} parent=1 // pred_fallthru
      _
    %v85 = vld [vmem:[#allocation2] sm:$0x3]
    %v86 = vld [vmem:[#allocation7] sm:$0xff]
    %v87 = vld [vmem:[#allocation7 + $0x8] sm:$0xff]
    %v88 = vld [vmem:[#allocation7 + $0x10] sm:$0xff]
    %v89 = vld [vmem:[#allocation7 + $0x18] sm:$0xff]
    %v90 = vld [vmem:[%s4] sm:$0x1]
    %v92 = vlaneseq
    %v93 = vshrl.u32 %v92, 7
    %v94 = vsub.s32 0, %v93
    %v95 = vrot.slane %v90, %v94
    %vm97 = vcmask 261120
    %v99 = vsel %vm97, %v85, 0
    %v102 = vsel %vm97, %v86, 0
    %v105 = vsel %vm97, %v87, 0
    %v108 = vsel %vm97, %v88, 0
    %v111 = vsel %vm97, %v89, 0
    %113 = vmatprep.subr.mxu0 0.0
    %114 = vmatpush1.xpose.msra.mxu0 %v102
    %115 = vmatprep.subr.mxu0 0.0
    %116 = vmatpush1.xpose.msra.mxu0 %v105
    %117 = vmatprep.subr.mxu0 0.0
    %118 = vmatpush1.xpose.msra.mxu0 %v108
    %119 = vmatprep.subr.mxu0 0.0
    %120 = vmatpush1.xpose.msra.mxu0 %v111
    %121 = vmatprep.subr.mxu0 0.0
    %122 = vmatpush1.xpose.msra.mxu0 0.0
    %123 = vmatprep.subr.mxu0 0.0
    %124 = vmatpush1.xpose.msra.mxu0 0.0
    %125 = vmatprep.subr.mxu0 0.0
    %126 = vmatpush1.xpose.msra.mxu0 0.0
    %127 = vmatprep.subr.mxu0 0.0
    %128 = vmatpush1.xpose.msra.mxu0 0.0
    %129 = vmatprep.subr.mxu0 0.0
    %130 = vmatpush1.xpose.msra.mxu0 0.0
    %131 = vmatprep.subr.mxu0 0.0
    %132 = vmatpush1.xpose.msra.mxu0 0.0
    %133 = vmatprep.subr.mxu0 0.0
    %134 = vmatpush1.xpose.msra.mxu0 0.0
    %135 = vmatprep.subr.mxu0 0.0
    %136 = vmatpush1.xpose.msra.mxu0 0.0
    %137 = vmatprep.subr.mxu0 0.0
    %138 = vmatpush1.xpose.msra.mxu0 0.0
    %139 = vmatprep.subr.mxu0 0.0
    %140 = vmatpush1.xpose.msra.mxu0 0.0
    %141 = vmatprep.subr.mxu0 0.0
    %142 = vmatpush1.xpose.msra.mxu0 0.0
    %143 = vmatprep.subr.mxu0 0.0
    %144 = vmatpush1.xpose.msra.mxu0 0.0
    %145 = vmatprep.subr.mxu0 0.0
    %146 = vmatpush1.xpose.msra.mxu0 0.0
    %147 = vmatprep.subr.mxu0 0.0
    %148 = vmatpush1.xpose.msra.mxu0 0.0
    %149 = vmatprep.subr.mxu0 0.0
    %150 = vmatpush1.xpose.msra.mxu0 0.0
    %151 = vmatprep.subr.mxu0 0.0
    %152 = vmatpush1.xpose.msra.mxu0 0.0
    %153 = vmatprep.subr.mxu0 0.0
    %154 = vmatpush1.xpose.msra.mxu0 0.0
    %155 = vmatprep.subr.mxu0 0.0
    %156 = vmatpush1.xpose.msra.mxu0 0.0
    %157 = vmatprep.subr.mxu0 0.0
    %158 = vmatpush1.xpose.msra.mxu0 0.0
    %159 = vmatprep.subr.mxu0 0.0
    %160 = vmatpush1.xpose.msra.mxu0 0.0
    %161 = vmatprep.subr.mxu0 0.0
    %162 = vmatpush1.xpose.msra.mxu0 0.0
    %163 = vmatprep.subr.mxu0 0.0
    %164 = vmatpush1.xpose.msra.mxu0 0.0
    %165 = vmatprep.subr.mxu0 0.0
    %166 = vmatpush1.xpose.msra.mxu0 0.0
    %167 = vmatprep.subr.mxu0 0.0
    %168 = vmatpush1.xpose.msra.mxu0 0.0
    %169 = vmatprep.subr.mxu0 0.0
    %170 = vmatpush1.xpose.msra.mxu0 0.0
    %171 = vmatprep.subr.mxu0 0.0
    %172 = vmatpush1.xpose.msra.mxu0 0.0
    %173 = vmatprep.subr.mxu0 0.0
    %174 = vmatpush1.xpose.msra.mxu0 0.0
    %175 = vmatprep.subr.mxu0 0.0
    %176 = vmatpush1.xpose.msra.mxu0 0.0
    %177 = vmatprep.mubr.f32.mxu0 0.0
    %178 = vmatmul.mubr.f32.gmra.mrb[0].mxu0 %v99
    %v179 = vpop.f32.mrb[0].mxu0
    %v180 = vadd.f32 %v95, %v179
    %v181 = vpop.f32.mrb[0].mxu0
    %182 = vdwg.mxu0
    %v183 = vld [vmem:[#allocation5] sm:$0xff]
    %v184 = vld [vmem:[#allocation5 + $0x8] sm:$0xff]
    %v185 = vld [vmem:[#allocation8] sm:$0xff]
    %v186 = vld [vmem:[#allocation8 + $0x8] sm:$0xff]
    %v187 = vld [vmem:[#allocation8 + $0x10] sm:$0xff]
    %v188 = vld [vmem:[#allocation8 + $0x18] sm:$0xff]
    %v189 = vlaneseq
    %v190 = vshrl.u32 %v189, 7
    %v191 = vadd.s32 %v190, 8
    %v192 = vcvt.s32.f32 %v190
    %v193 = vcvt.s32.f32 %v191
    %v194 = vstv %s78
    %v195 = vadd.f32 %v192, %v194
    %v196 = vadd.f32 %v193, %v194
    %v197 = vrcp.pop 2.0
    %v198 = vmul.f32 %v195, %v197
    %v199 = vmul.f32 %v196, %v197
    %v200 = vfloor.f32 %v198
    %v201 = vfloor.f32 %v199
    %v202 = vmul.f32 %v200, 2.0
    %v203 = vmul.f32 %v201, 2.0
    %v204 = vsub.f32 %v195, %v202
    %v205 = vsub.f32 %v196, %v203
    %v206 = vlaneseq
    %v207 = vand.u32 %v206, 127
    %v208 = vcvt.s32.f32 %v207
    %vm209 = vcmp.eq.f32.partialorder %v204, %v208
    %vm210 = vcmp.eq.f32.partialorder %v205, %v208
    %v211 = vsel %vm209, 1, 0
    %v212 = vsel %vm210, 1, 0
    %v213 = vcvt.s32.f32 %v211
    %v214 = vcvt.s32.f32 %v212
    %vm215 = vcmask 15360
    %v217 = vsel %vm215, %v213, 0
    %v220 = vsel %vm215, %v214, 0
    %vm222 = vcmask 1041408
    %v224 = vsel %vm222, %v180, 0
    %226 = vmatprep.subr.mxu0 0.0
    %227 = vmatpush1.msra.mxu0 %v224
    %228 = vmatprep.subr.mxu0 0.0
    %229 = vmatpush1.msra.mxu0 0.0
    %230 = vmatprep.subr.mxu0 0.0
    %231 = vmatpush1.msra.mxu0 0.0
    %232 = vmatprep.subr.mxu0 0.0
    %233 = vmatpush1.msra.mxu0 0.0
    %234 = vmatprep.subr.mxu0 0.0
    %235 = vmatpush1.msra.mxu0 0.0
    %236 = vmatprep.subr.mxu0 0.0
    %237 = vmatpush1.msra.mxu0 0.0
    %238 = vmatprep.subr.mxu0 0.0
    %239 = vmatpush1.msra.mxu0 0.0
    %240 = vmatprep.subr.mxu0 0.0
    %241 = vmatpush1.msra.mxu0 0.0
    %242 = vmatprep.subr.mxu0 0.0
    %243 = vmatpush1.msra.mxu0 0.0
    %244 = vmatprep.subr.mxu0 0.0
    %245 = vmatpush1.msra.mxu0 0.0
    %246 = vmatprep.subr.mxu0 0.0
    %247 = vmatpush1.msra.mxu0 0.0
    %248 = vmatprep.subr.mxu0 0.0
    %249 = vmatpush1.msra.mxu0 0.0
    %250 = vmatprep.subr.mxu0 0.0
    %251 = vmatpush1.msra.mxu0 0.0
    %252 = vmatprep.subr.mxu0 0.0
    %253 = vmatpush1.msra.mxu0 0.0
    %254 = vmatprep.subr.mxu0 0.0
    %255 = vmatpush1.msra.mxu0 0.0
    %256 = vmatprep.subr.mxu0 0.0
    %257 = vmatpush1.msra.mxu0 0.0
    %258 = vmatprep.subr.mxu0 0.0
    %259 = vmatpush1.msra.mxu0 0.0
    %260 = vmatprep.subr.mxu0 0.0
    %261 = vmatpush1.msra.mxu0 0.0
    %262 = vmatprep.subr.mxu0 0.0
    %263 = vmatpush1.msra.mxu0 0.0
    %264 = vmatprep.subr.mxu0 0.0
    %265 = vmatpush1.msra.mxu0 0.0
    %266 = vmatprep.subr.mxu0 0.0
    %267 = vmatpush1.msra.mxu0 0.0
    %268 = vmatprep.subr.mxu0 0.0
    %269 = vmatpush1.msra.mxu0 0.0
    %270 = vmatprep.subr.mxu0 0.0
    %271 = vmatpush1.msra.mxu0 0.0
    %272 = vmatprep.subr.mxu0 0.0
    %273 = vmatpush1.msra.mxu0 0.0
    %274 = vmatprep.subr.mxu0 0.0
    %275 = vmatpush1.msra.mxu0 0.0
    %276 = vmatprep.subr.mxu0 0.0
    %277 = vmatpush1.msra.mxu0 0.0
    %278 = vmatprep.subr.mxu0 0.0
    %279 = vmatpush1.msra.mxu0 0.0
    %280 = vmatprep.subr.mxu0 0.0
    %281 = vmatpush1.msra.mxu0 0.0
    %282 = vmatprep.subr.mxu0 0.0
    %283 = vmatpush1.msra.mxu0 0.0
    %284 = vmatprep.subr.mxu0 0.0
    %285 = vmatpush1.msra.mxu0 0.0
    %286 = vmatprep.subr.mxu0 0.0
    %287 = vmatpush1.msra.mxu0 0.0
    %288 = vmatprep.subr.mxu0 0.0
    %289 = vmatpush1.msra.mxu0 0.0
    %290 = vmatprep.mubr.f32.mxu0 0.0
    %291 = vmatmul.mubr.f32.gmra.mrb[0].mxu0 %v217
    %v292 = vpop.f32.mrb[0].mxu0
    %v293 = vadd.f32 0.0, %v292
    %v294 = vpop.f32.mrb[0].mxu0
    %295 = vmatprep.mubr.f32.mxu0 0.0
    %296 = vmatmul.mubr.f32.gmra.mrb[0].mxu0 %v220
    %v297 = vpop.f32.mrb[0].mxu0
    %v298 = vadd.f32 0.0, %v297
    %v299 = vpop.f32.mrb[0].mxu0
    %300 = vdwg.mxu0
    %v302 = vsel %vm97, %v183, 0
    %v305 = vsel %vm97, %v184, 0
    %v308 = vsel %vm97, %v185, 0
    %v311 = vsel %vm97, %v186, 0
    %v314 = vsel %vm97, %v187, 0
    %v317 = vsel %vm97, %v188, 0
    %319 = vmatprep.subr.mxu0 0.0
    %320 = vmatpush1.xpose.msra.mxu0 %v308
    %321 = vmatprep.subr.mxu0 0.0
    %322 = vmatpush1.xpose.msra.mxu0 %v311
    %323 = vmatprep.subr.mxu0 0.0
    %324 = vmatpush1.xpose.msra.mxu0 %v314
    %325 = vmatprep.subr.mxu0 0.0
    %326 = vmatpush1.xpose.msra.mxu0 %v317
    %327 = vmatprep.subr.mxu0 0.0
    %328 = vmatpush1.xpose.msra.mxu0 0.0
    %329 = vmatprep.subr.mxu0 0.0
    %330 = vmatpush1.xpose.msra.mxu0 0.0
    %331 = vmatprep.subr.mxu0 0.0
    %332 = vmatpush1.xpose.msra.mxu0 0.0
    %333 = vmatprep.subr.mxu0 0.0
    %334 = vmatpush1.xpose.msra.mxu0 0.0
    %335 = vmatprep.subr.mxu0 0.0
    %336 = vmatpush1.xpose.msra.mxu0 0.0
    %337 = vmatprep.subr.mxu0 0.0
    %338 = vmatpush1.xpose.msra.mxu0 0.0
    %339 = vmatprep.subr.mxu0 0.0
    %340 = vmatpush1.xpose.msra.mxu0 0.0
    %341 = vmatprep.subr.mxu0 0.0
    %342 = vmatpush1.xpose.msra.mxu0 0.0
    %343 = vmatprep.subr.mxu0 0.0
    %344 = vmatpush1.xpose.msra.mxu0 0.0
    %345 = vmatprep.subr.mxu0 0.0
    %346 = vmatpush1.xpose.msra.mxu0 0.0
    %347 = vmatprep.subr.mxu0 0.0
    %348 = vmatpush1.xpose.msra.mxu0 0.0
    %349 = vmatprep.subr.mxu0 0.0
    %350 = vmatpush1.xpose.msra.mxu0 0.0
    %351 = vmatprep.subr.mxu0 0.0
    %352 = vmatpush1.xpose.msra.mxu0 0.0
    %353 = vmatprep.subr.mxu0 0.0
    %354 = vmatpush1.xpose.msra.mxu0 0.0
    %355 = vmatprep.subr.mxu0 0.0
    %356 = vmatpush1.xpose.msra.mxu0 0.0
    %357 = vmatprep.subr.mxu0 0.0
    %358 = vmatpush1.xpose.msra.mxu0 0.0
    %359 = vmatprep.subr.mxu0 0.0
    %360 = vmatpush1.xpose.msra.mxu0 0.0
    %361 = vmatprep.subr.mxu0 0.0
    %362 = vmatpush1.xpose.msra.mxu0 0.0
    %363 = vmatprep.subr.mxu0 0.0
    %364 = vmatpush1.xpose.msra.mxu0 0.0
    %365 = vmatprep.subr.mxu0 0.0
    %366 = vmatpush1.xpose.msra.mxu0 0.0
    %367 = vmatprep.subr.mxu0 0.0
    %368 = vmatpush1.xpose.msra.mxu0 0.0
    %369 = vmatprep.subr.mxu0 0.0
    %370 = vmatpush1.xpose.msra.mxu0 0.0
    %371 = vmatprep.subr.mxu0 0.0
    %372 = vmatpush1.xpose.msra.mxu0 0.0
    %373 = vmatprep.subr.mxu0 0.0
    %374 = vmatpush1.xpose.msra.mxu0 0.0
    %375 = vmatprep.subr.mxu0 0.0
    %376 = vmatpush1.xpose.msra.mxu0 0.0
    %377 = vmatprep.subr.mxu0 0.0
    %378 = vmatpush1.xpose.msra.mxu0 0.0
    %379 = vmatprep.subr.mxu0 0.0
    %380 = vmatpush1.xpose.msra.mxu0 0.0
    %381 = vmatprep.subr.mxu0 0.0
    %382 = vmatpush1.xpose.msra.mxu0 0.0
    %383 = vmatprep.mubr.f32.mxu0 0.0
    %384 = vmatmul.mubr.f32.gmra.mrb[0].mxu0 %v302
    %v385 = vpop.f32.mrb[0].mxu0
    %v386 = vadd.f32 %v293, %v385
    %v387 = vpop.f32.mrb[0].mxu0
    %388 = vmatprep.mubr.f32.mxu0 0.0
    %389 = vmatmul.mubr.f32.gmra.mrb[0].mxu0 %v305
    %v390 = vpop.f32.mrb[0].mxu0
    %v391 = vadd.f32 %v298, %v390
    %v392 = vpop.f32.mrb[0].mxu0
    %393 = vdwg.mxu0
    %v394 = vtanh.pop %v386
    %v395 = vtanh.pop %v391
    %v396 = vld [vmem:[%s5] sm:$0x1]
    %v398 = vlaneseq
    %v399 = vshrl.u32 %v398, 7
    %v400 = vsub.s32 0, %v399
    %v401 = vrot.slane %v396, %v400
    %v403 = vmul.f32 %v394, %v401
    %v404 = vmul.f32 %v395, %v401
    %v405 = vsel %vm97, %v403, 0.0
    %406 = vadd.xlane.f32.xlu0 %v405
    %v407 = vpop.xlane.xlu0 %406
    %v408 = vsel %vm97, %v404, 0.0
    %409 = vadd.xlane.f32.xlu0 %v408
    %v410 = vpop.xlane.xlu0 %409
    %vm411 = vcmp.lt.f32.partialorder %v195, 16.0
    %vm412 = vcmp.lt.f32.partialorder %v196, 16.0
    %v413 = vsel %vm411, %v407, 0.0
    %v414 = vsel %vm412, %v410, 0.0
    %vm415 = vcmp.eq.f32.partialorder %v200, %v208
    %vm416 = vcmp.eq.f32.partialorder %v201, %v208
    %v417 = vsel %vm415, 1, 0
    %v418 = vsel %vm416, 1, 0
    %v419 = vcvt.s32.f32 %v417
    %v420 = vcvt.s32.f32 %v418
    %v421 = vadd.f32 %v208, %v194
    %v422 = vmul.f32 %v421, %v197
    %v423 = vfloor.f32 %v422
    %v424 = vmul.f32 %v423, 2.0
    %v425 = vsub.f32 %v421, %v424
    %vm426 = vcmp.eq.f32.partialorder %v425, %v192
    %v427 = vsel %vm426, 1, 0
    %v428 = vcvt.s32.f32 %v427
    %v429 = vld [vmem:[#allocation10] sm:$0x3]
    %v430 = vmul.f32 %v413, %v419
    %v431 = vmul.f32 %v414, %v420
    %vm432 = vcmask 130048
    %v434 = vsel %vm432, %v428, 0
    %436 = vmatprep.subr.mxu0 0.0
    %437 = vmatpush1.msra.mxu0 %v430
    %438 = vmatprep.subr.mxu0 0.0
    %439 = vmatpush1.msra.mxu0 %v431
    %440 = vmatprep.subr.mxu0 0.0
    %441 = vmatpush1.msra.mxu0 0.0
    %442 = vmatprep.subr.mxu0 0.0
    %443 = vmatpush1.msra.mxu0 0.0
    %444 = vmatprep.subr.mxu0 0.0
    %445 = vmatpush1.msra.mxu0 0.0
    %446 = vmatprep.subr.mxu0 0.0
    %447 = vmatpush1.msra.mxu0 0.0
    %448 = vmatprep.subr.mxu0 0.0
    %449 = vmatpush1.msra.mxu0 0.0
    %450 = vmatprep.subr.mxu0 0.0
    %451 = vmatpush1.msra.mxu0 0.0
    %452 = vmatprep.subr.mxu0 0.0
    %453 = vmatpush1.msra.mxu0 0.0
    %454 = vmatprep.subr.mxu0 0.0
    %455 = vmatpush1.msra.mxu0 0.0
    %456 = vmatprep.subr.mxu0 0.0
    %457 = vmatpush1.msra.mxu0 0.0
    %458 = vmatprep.subr.mxu0 0.0
    %459 = vmatpush1.msra.mxu0 0.0
    %460 = vmatprep.subr.mxu0 0.0
    %461 = vmatpush1.msra.mxu0 0.0
    %462 = vmatprep.subr.mxu0 0.0
    %463 = vmatpush1.msra.mxu0 0.0
    %464 = vmatprep.subr.mxu0 0.0
    %465 = vmatpush1.msra.mxu0 0.0
    %466 = vmatprep.subr.mxu0 0.0
    %467 = vmatpush1.msra.mxu0 0.0
    %468 = vmatprep.subr.mxu0 0.0
    %469 = vmatpush1.msra.mxu0 0.0
    %470 = vmatprep.subr.mxu0 0.0
    %471 = vmatpush1.msra.mxu0 0.0
    %472 = vmatprep.subr.mxu0 0.0
    %473 = vmatpush1.msra.mxu0 0.0
    %474 = vmatprep.subr.mxu0 0.0
    %475 = vmatpush1.msra.mxu0 0.0
    %476 = vmatprep.subr.mxu0 0.0
    %477 = vmatpush1.msra.mxu0 0.0
    %478 = vmatprep.subr.mxu0 0.0
    %479 = vmatpush1.msra.mxu0 0.0
    %480 = vmatprep.subr.mxu0 0.0
    %481 = vmatpush1.msra.mxu0 0.0
    %482 = vmatprep.subr.mxu0 0.0
    %483 = vmatpush1.msra.mxu0 0.0
    %484 = vmatprep.subr.mxu0 0.0
    %485 = vmatpush1.msra.mxu0 0.0
    %486 = vmatprep.subr.mxu0 0.0
    %487 = vmatpush1.msra.mxu0 0.0
    %488 = vmatprep.subr.mxu0 0.0
    %489 = vmatpush1.msra.mxu0 0.0
    %490 = vmatprep.subr.mxu0 0.0
    %491 = vmatpush1.msra.mxu0 0.0
    %492 = vmatprep.subr.mxu0 0.0
    %493 = vmatpush1.msra.mxu0 0.0
    %494 = vmatprep.subr.mxu0 0.0
    %495 = vmatpush1.msra.mxu0 0.0
    %496 = vmatprep.subr.mxu0 0.0
    %497 = vmatpush1.msra.mxu0 0.0
    %498 = vmatprep.subr.mxu0 0.0
    %499 = vmatpush1.msra.mxu0 0.0
    %500 = vmatprep.mubr.f32.mxu0 0.0
    %501 = vmatmul.mubr.f32.gmra.mrb[0].mxu0 %v434
    %v502 = vpop.f32.mrb[0].mxu0
    %v503 = vadd.f32 0.0, %v502
    %v504 = vpop.f32.mrb[0].mxu0
    %505 = vdwg.mxu0
    %v506 = vadd.f32 %v429, %v503
    %vm507 = vcmask 58368
    %508 = vst.msk [vmem:[#allocation10] sm:$0x3] %vm507, %v506
    // Predicated region
    $region46: #{tpu_custom_call.1} parent=1 // pred_check
      %p509 = pneg %p79
    $region47: #{tpu_custom_call.1} parent=1 // pred_check_branch
      %511 = sbr.rel (%p509) target = $region49
    $region48: #{tpu_custom_call.1} parent=1 // pred_region
      %v512 = vld [vmem:[#allocation10] sm:$0x3]
      %v513 = vsel %vm507, %v512, -inf
      %514 = vmax.xlane.f32.xlu0 %v513
      %v515 = vpop.xlane.xlu0 %514
      %v516 = vsub.f32 %v512, %v515
      %v517 = vmul.f32 %v516, 1.442695
      %v518 = vpow.pop %v517
      %v519 = vsel %vm507, %v518, 0.0
      %520 = vadd.xlane.f32.xlu0 %v519
      %v521 = vpop.xlane.xlu0 %520
      %v522 = vrcp.pop %v521
      %v523 = vmul.f32 %v521, %v522
      %v524 = vsub.f32 2.0, %v523
      %v525 = vmul.f32 %v522, %v524
      %v526 = vmul.f32 %v521, %v525
      %v527 = vsub.f32 2.0, %v526
      %v528 = vmul.f32 %v525, %v527
      %v529 = vmul.f32 %v518, %v528
      %530 = vst.msk [vmem:[#allocation10] sm:$0x3] %vm507, %v529
    $region49: #{tpu_custom_call.1} parent=1 // pred_fallthru
      _
    // Predicated region
    $region50: #{tpu_custom_call.1} parent=1 // pred_check
      _
    $region51: #{tpu_custom_call.1} parent=1 // pred_check_branch
      %532 = sbr.rel (0) target = $region53
    $region52: #{tpu_custom_call.1} parent=1 // pred_region
      %s534 = ssub.s32 32, 32
      %535 = vsyncadd [#allocation4], %s534
      %s537 = sshll.u32 [#allocation10], 4
      %s538 = int_to_ptr.vmem [resolvable:$true] %s537
      %540 = dma.vmem_to_hbm [thread:$0]  %s538, 32, %s6, [#allocation4]
    $region53: #{tpu_custom_call.1} parent=1 // pred_fallthru
      _
    // Predicated region
    $region54: #{tpu_custom_call.1} parent=1 // pred_check
      _
    $region55: #{tpu_custom_call.1} parent=1 // pred_check_branch
      %542 = sbr.rel (0) target = $region57
    $region56: #{tpu_custom_call.1} parent=1 // pred_region
      %543 = dma.done [#allocation4], 32
    $region57: #{tpu_custom_call.1} parent=1 // pred_fallthru
      _
    %544 = vsyncpa [#allocation3], 1
    %545 = vsyncpa [#allocation6], 1
    %546 = vsyncpa [#allocation9], 1
    %547 = vsyncpa [#allocation4], 1

</llo_original>
